<compile_context>
chip_gen: v6e
topology: v6e:2x2x1
jax: 0.10.0
libtpu: 0.0.40
codegen_flags: <defaults>
</compile_context>

<pallas_src>
import functools

import jax
import jax.numpy as jnp
from jax.experimental import pallas as pl
from jax.experimental.pallas import tpu as pltpu


def _round_up(x, m):
    return ((x + m - 1) // m) * m


def _silu(x):
    # SiLU(x) = x * sigmoid(x);  sigmoid(x) = 0.5 * tanh(0.5 * x) + 0.5.
    # tanh is a single EUP op (vs exp + reciprocal = 2); the rest is cheap VPU.
    return x * (0.5 * jnp.tanh(0.5 * x) + 0.5)


def _make_critic_kernel(n_sub):
    """Kernel for one batch tile of n_sub * sub lanes, processed per sub-block."""

    def kernel(xt_ref, w1_ref, w2_ref, b2_ref, w3_ref, b3_ref, out_ref):
        # xt  : [n_sub, Fp, sub] bf16  batch on lanes; row F is ones (folds b1)
        # w1  : [H, Fp]  bf16  (W1^T with b1 appended as a column)  VMEM-resident
        # w2  : [H, H]   bf16  (W2^T)                               VMEM-resident
        # b2  : [H, 1]   f32                                        VMEM-resident
        # w3  : [1, H]   bf16  (W3^T)                               VMEM-resident
        # b3  : [1, 1]   f32   SMEM scalar
        # out : [n_sub, 1, sub] f32   lane-dense
        w1 = w1_ref[...]
        w2 = w2_ref[...]
        b2 = b2_ref[...]
        w3 = w3_ref[...]
        b3 = b3_ref[0, 0]

        # Statically unrolled sub-block loop (n_sub <= 4, static slices only):
        # keeps live f32 intermediates at [H, sub] instead of [H, n_sub*sub].
        for j in range(n_sub):
            x = xt_ref[j]                                              # [Fp, sub] bf16
            h1 = _silu(jnp.dot(w1, x, preferred_element_type=jnp.float32))
            h2 = _silu(jnp.dot(w2, h1.astype(jnp.bfloat16),
                               preferred_element_type=jnp.float32) + b2)
            o = jnp.dot(w3, h2.astype(jnp.bfloat16),
                        preferred_element_type=jnp.float32)           # [1, sub] f32
            out_ref[j] = o + b3

    return kernel


def prepare_critic_params(params):
    """One-time weight preprocessing — hoisted out of the per-call hot path."""
    w1, b1, w2, b2, w3, b3 = params
    F = w1.shape[0]                       # in_dim + 1
    H = w1.shape[1]                       # 128
    Fp = _round_up(F + 1, 8)              # +1 ones row (folds b1), sublane-aligned
    w1_aug = jnp.zeros((Fp, H), jnp.float32)
    w1_aug = w1_aug.at[:F, :].set(w1.astype(jnp.float32))
    w1_aug = w1_aug.at[F, :].set(b1.reshape(-1).astype(jnp.float32))
    w1t = w1_aug.T.astype(jnp.bfloat16)                  # [H, Fp]
    w2t = w2.T.astype(jnp.bfloat16)                      # [H, H]
    w3t = w3.T.astype(jnp.bfloat16)                      # [1, H]
    b2c = b2.reshape(-1, 1).astype(jnp.float32)          # [H, 1]
    b3s = b3.reshape(1, 1).astype(jnp.float32)           # [1, 1] -> SMEM
    return (w1t, w2t, b2c, w3t, b3s)


@functools.partial(jax.jit, static_argnames=("tile_b",))
def critic_forward(s, a, prep, *, tile_b=1024):
    """s: [B, in_dim], a: [B, 1] -> [B]  (matches torch `.squeeze(1)`)."""
    w1t, w2t, b2c, w3t, b3s = prep
    B, in_dim = s.shape
    H, Fp = w1t.shape

    # ---- batch tiling --------------------------------------------------------
    # sub : lane width of one in-kernel sub-block (vreg-friendly, 256-MXU fill)
    # tb  : batch lanes per grid step = n_sub * sub; chosen so the "parallel"
    #       grid has >= 2 tiles whenever B allows (v7x megacore sharding).
    sub = 128 if B <= 128 else 256
    tile_b = max(sub, (tile_b // sub) * sub)
    tb = min(tile_b, _round_up(pl.cdiv(B, 2), sub))
    n_sub = tb // sub
    grid_b = pl.cdiv(B, tb)
    Bp = grid_b * tb
    nblk = Bp // sub

    # ---- input glue (single fused concat / pad / transpose under jit) -------
    ones = jnp.ones((B, 1), jnp.float32)
    cols = [s.astype(jnp.float32), a.astype(jnp.float32), ones]
    if Fp > in_dim + 2:
        cols.append(jnp.zeros((B, Fp - (in_dim + 2)), jnp.float32))
    x = jnp.concatenate(cols, axis=1).astype(jnp.bfloat16)          # [B, Fp]
    if Bp != B:
        x = jnp.pad(x, ((0, Bp - B), (0, 0)))
    xt = x.reshape(nblk, sub, Fp).transpose(0, 2, 1)                 # [nblk, Fp, sub]

    def _resident(shape):
        return pl.BlockSpec(shape, lambda i: (0,) * len(shape))

    out = pl.pallas_call(
        _make_critic_kernel(n_sub),
        out_shape=jax.ShapeDtypeStruct((nblk, 1, sub), jnp.float32),
        grid=(grid_b,),
        in_specs=[
            pl.BlockSpec((n_sub, Fp, sub), lambda i: (i, 0, 0)),     # x tile (lane-dense)
            _resident((H, Fp)),                                      # W1^T (b1 folded)
            _resident((H, H)),                                       # W2^T
            _resident((H, 1)),                                       # b2
            _resident((1, H)),                                       # W3^T
            pl.BlockSpec(memory_space=pltpu.MemorySpace.SMEM),       # b3 scalar
        ],
        out_specs=pl.BlockSpec((n_sub, 1, sub), lambda i: (i, 0, 0)),
        compiler_params=pltpu.CompilerParams(
            dimension_semantics=("parallel",),   # shard batch tiles across TCs on v7x
        ),
    )(xt, w1t, w2t, b2c, w3t, b3s)

    return out.reshape(Bp)[:B]


def init_params(key, in_dim=4):
    """Deterministic init mimicking nn.Linear's U(-1/sqrt(fan_in), 1/sqrt(fan_in))."""
    dims = [(in_dim + 1, 128), (128, 128), (128, 1)]
    params = []
    for i, (fin, fout) in enumerate(dims):
        kw, kb = jax.random.split(jax.random.fold_in(key, i))
        bound = 1.0 / (fin ** 0.5)
        w = jax.random.uniform(kw, (fin, fout), jnp.float32, -bound, bound)
        b = jax.random.uniform(kb, (1, fout), jnp.float32, -bound, bound)
        params += [w, b]
    return tuple(params)


def critic_reference(s, a, params):
    """Pure-JAX f32 reference for a sanity check."""
    w1, b1, w2, b2, w3, b3 = params
    x = jnp.concatenate([s, a], axis=1)
    h = jax.nn.silu(x @ w1 + b1)
    h = jax.nn.silu(h @ w2 + b2)
    return (h @ w3 + b3)[:, 0]


if __name__ == "__main__":
    key = jax.random.PRNGKey(0)
    in_dim = 4

    k_s, k_a, k_p = jax.random.split(key, 3)
    params = init_params(k_p, in_dim=in_dim)
    prep = prepare_critic_params(params)     # one-time weight prep, reused per call

    # Small-shape check (B=8): single 128-lane tile, grid=1, n_sub=1.
    B = 8
    s = jax.random.normal(k_s, (B, in_dim), jnp.float32)
    a = jax.random.normal(k_a, (B, 1), jnp.float32)
    out = jax.block_until_ready(critic_forward(s, a, prep))
    ref = critic_reference(s, a, params)
    assert out.shape == (B,), out.shape
    # bf16 matmul inputs -> relaxed tolerance vs the f32 reference.
    assert jnp.allclose(out, ref, atol=2e-2, rtol=2e-2), (out, ref)

    # Multi-tile path: B=600 -> sub=256, tb=512 (n_sub=2), grid=2, batch padded to 1024.
    B2 = 600
    k_s2, k_a2 = jax.random.split(jax.random.fold_in(key, 7))
    s2 = jax.random.normal(k_s2, (B2, in_dim), jnp.float32)
    a2 = jax.random.normal(k_a2, (B2, 1), jnp.float32)
    out2 = jax.block_until_ready(critic_forward(s2, a2, prep))
    ref2 = critic_reference(s2, a2, params)
    assert out2.shape == (B2,), out2.shape
    assert jnp.allclose(out2, ref2, atol=2e-2, rtol=2e-2), (out2, ref2)

    print("KERNEL_OK")
</pallas_src>

<mosaic_0001>
module attributes {stable_mosaic.version = 11 : i64} {
  func.func @kernel(%arg0: i32, %arg1: memref<1x8x128xbf16, #tpu.memory_space<vmem>>, %arg2: memref<128x8xbf16, #tpu.memory_space<vmem>>, %arg3: memref<128x128xbf16, #tpu.memory_space<vmem>>, %arg4: memref<128x1xf32, #tpu.memory_space<vmem>>, %arg5: memref<1x128xbf16, #tpu.memory_space<vmem>>, %arg6: memref<1x1xf32, #tpu.memory_space<smem>>, %arg7: memref<1x1x128xf32, #tpu.memory_space<vmem>>) attributes {dimension_semantics = [#tpu.dimension_semantics<parallel>], iteration_bounds = array<i64: 1>, scalar_prefetch = 0 : i64, scratch_operands = 0 : i64, tpu.core_type = #tpu.core_type<tc>, window_params = [{transform_indices = @transform_0, window_bounds = array<i64: 1, 8, 128>}, {pipeline_mode = #tpu.pipeline_mode<synchronous>, transform_indices = @transform_1, window_bounds = array<i64: 128, 8>}, {pipeline_mode = #tpu.pipeline_mode<synchronous>, transform_indices = @transform_2, window_bounds = array<i64: 128, 128>}, {pipeline_mode = #tpu.pipeline_mode<synchronous>, transform_indices = @transform_3, window_bounds = array<i64: 128, 1>}, {pipeline_mode = #tpu.pipeline_mode<synchronous>, transform_indices = @transform_4, window_bounds = array<i64: 1, 128>}, {transform_indices = @transform_5, window_bounds = array<i64: 1, 1>}, {transform_indices = @transform_6, window_bounds = array<i64: 1, 1, 128>}]} {
    %c0 = arith.constant 0 : index
    %c0_0 = arith.constant 0 : index
    %0 = vector.load %arg2[%c0, %c0_0] : memref<128x8xbf16, #tpu.memory_space<vmem>>, vector<128x8xbf16>
    %c0_1 = arith.constant 0 : index
    %c0_2 = arith.constant 0 : index
    %1 = vector.load %arg3[%c0_1, %c0_2] : memref<128x128xbf16, #tpu.memory_space<vmem>>, vector<128x128xbf16>
    %c0_3 = arith.constant 0 : index
    %c0_4 = arith.constant 0 : index
    %2 = vector.load %arg4[%c0_3, %c0_4] : memref<128x1xf32, #tpu.memory_space<vmem>>, vector<128x1xf32>
    %c0_5 = arith.constant 0 : index
    %c0_6 = arith.constant 0 : index
    %3 = vector.load %arg5[%c0_5, %c0_6] : memref<1x128xbf16, #tpu.memory_space<vmem>>, vector<1x128xbf16>
    %c0_7 = arith.constant 0 : index
    %c0_8 = arith.constant 0 : index
    %4 = memref.load %arg6[%c0_7, %c0_8] : memref<1x1xf32, #tpu.memory_space<smem>>
    %c0_9 = arith.constant 0 : index
    %c0_10 = arith.constant 0 : index
    %c0_11 = arith.constant 0 : index
    %5 = vector.load %arg1[%c0_9, %c0_10, %c0_11] : memref<1x8x128xbf16, #tpu.memory_space<vmem>>, vector<1x8x128xbf16>
    %6 = vector.shape_cast %5 : vector<1x8x128xbf16> to vector<8x128xbf16>
    %cst = arith.constant dense<0.000000e+00> : vector<128x128xf32>
    %7 = tpu.matmul %0, %6, %cst {dimension_numbers = #tpu.dot_dimension_numbers<[1], [0], [0], [1], [0, 0, 1, 1], [], []>} : vector<128x8xbf16>, vector<8x128xbf16>, vector<128x128xf32> -> vector<128x128xf32>
    %cst_12 = arith.constant 5.000000e-01 : f32
    %8 = vector.broadcast %cst_12 : f32 to vector<128x128xf32>
    %9 = arith.mulf %8, %7 : vector<128x128xf32>
    %10 = math.tanh %9 : vector<128x128xf32>
    %cst_13 = arith.constant 5.000000e-01 : f32
    %11 = vector.broadcast %cst_13 : f32 to vector<128x128xf32>
    %12 = arith.mulf %11, %10 : vector<128x128xf32>
    %cst_14 = arith.constant 5.000000e-01 : f32
    %13 = vector.broadcast %cst_14 : f32 to vector<128x128xf32>
    %14 = arith.addf %12, %13 : vector<128x128xf32>
    %15 = arith.mulf %7, %14 : vector<128x128xf32>
    %16 = arith.truncf %15 : vector<128x128xf32> to vector<128x128xbf16>
    %cst_15 = arith.constant dense<0.000000e+00> : vector<128x128xf32>
    %17 = tpu.matmul %1, %16, %cst_15 {dimension_numbers = #tpu.dot_dimension_numbers<[1], [0], [0], [1], [0, 0, 1, 1], [], []>} : vector<128x128xbf16>, vector<128x128xbf16>, vector<128x128xf32> -> vector<128x128xf32>
    %18 = vector.broadcast %2 : vector<128x1xf32> to vector<128x128xf32>
    %19 = arith.addf %17, %18 : vector<128x128xf32>
    %cst_16 = arith.constant 5.000000e-01 : f32
    %20 = vector.broadcast %cst_16 : f32 to vector<128x128xf32>
    %21 = arith.mulf %20, %19 : vector<128x128xf32>
    %22 = math.tanh %21 : vector<128x128xf32>
    %cst_17 = arith.constant 5.000000e-01 : f32
    %23 = vector.broadcast %cst_17 : f32 to vector<128x128xf32>
    %24 = arith.mulf %23, %22 : vector<128x128xf32>
    %cst_18 = arith.constant 5.000000e-01 : f32
    %25 = vector.broadcast %cst_18 : f32 to vector<128x128xf32>
    %26 = arith.addf %24, %25 : vector<128x128xf32>
    %27 = arith.mulf %19, %26 : vector<128x128xf32>
    %28 = arith.truncf %27 : vector<128x128xf32> to vector<128x128xbf16>
    %cst_19 = arith.constant dense<0.000000e+00> : vector<1x128xf32>
    %29 = tpu.matmul %3, %28, %cst_19 {dimension_numbers = #tpu.dot_dimension_numbers<[1], [0], [0], [1], [0, 0, 1, 1], [], []>} : vector<1x128xbf16>, vector<128x128xbf16>, vector<1x128xf32> -> vector<1x128xf32>
    %30 = vector.broadcast %4 : f32 to vector<1x128xf32>
    %31 = arith.addf %29, %30 : vector<1x128xf32>
    %c0_20 = arith.constant 0 : index
    %c0_21 = arith.constant 0 : index
    %c0_22 = arith.constant 0 : index
    %32 = vector.load %arg7[%c0_20, %c0_21, %c0_22] : memref<1x1x128xf32, #tpu.memory_space<vmem>>, vector<1x1x128xf32>
    %33 = vector.shape_cast %32 : vector<1x1x128xf32> to vector<1x128xf32>
    %34 = vector.shape_cast %31 : vector<1x128xf32> to vector<1x1x128xf32>
    tpu.vector_store %arg7[%c0_20, %c0_21, %c0_22], %34 {strides = array<i32>} : memref<1x1x128xf32, #tpu.memory_space<vmem>>, vector<1x1x128xf32>,
    return
  }
  func.func @transform_0(%arg0: i32) -> (i32, i32, i32) {
    %c0_i32 = arith.constant 0 : i32
    %c0_i32_0 = arith.constant 0 : i32
    %c0_i32_1 = arith.constant 0 : i32
    return %arg0, %c0_i32, %c0_i32_0 : i32, i32, i32
  }
  func.func @transform_1(%arg0: i32) -> (i32, i32) {
    %c0_i32 = arith.constant 0 : i32
    %c0_i32_0 = arith.constant 0 : i32
    %c0_i32_1 = arith.constant 0 : i32
    return %c0_i32, %c0_i32_0 : i32, i32
  }
  func.func @transform_2(%arg0: i32) -> (i32, i32) {
    %c0_i32 = arith.constant 0 : i32
    %c0_i32_0 = arith.constant 0 : i32
    %c0_i32_1 = arith.constant 0 : i32
    return %c0_i32, %c0_i32_0 : i32, i32
  }
  func.func @transform_3(%arg0: i32) -> (i32, i32) {
    %c0_i32 = arith.constant 0 : i32
    %c0_i32_0 = arith.constant 0 : i32
    %c0_i32_1 = arith.constant 0 : i32
    return %c0_i32, %c0_i32_0 : i32, i32
  }
  func.func @transform_4(%arg0: i32) -> (i32, i32) {
    %c0_i32 = arith.constant 0 : i32
    %c0_i32_0 = arith.constant 0 : i32
    %c0_i32_1 = arith.constant 0 : i32
    return %c0_i32, %c0_i32_0 : i32, i32
  }
  func.func @transform_5(%arg0: i32) -> (i32, i32) {
    %c0_i32 = arith.constant 0 : i32
    %c0_i32_0 = arith.constant 0 : i32
    %c0_i32_1 = arith.constant 0 : i32
    return %c0_i32, %c0_i32_0 : i32, i32
  }
  func.func @transform_6(%arg0: i32) -> (i32, i32, i32) {
    %c0_i32 = arith.constant 0 : i32
    %c0_i32_0 = arith.constant 0 : i32
    %c0_i32_1 = arith.constant 0 : i32
    return %arg0, %c0_i32, %c0_i32_0 : i32, i32, i32
  }
}

</mosaic_0001>

<llo_original>
// kernel: critic_forward.1
$region0: #{critic_forward.1}
  #allocation0 [shape = 'u32[]', space=smem, size = 0x4, offset = 0x4, fixed_abs, tag = 'smem constant byte address 0x4 - core index']
  #allocation1 [shape = 'u32[144,128]{1,0:T(1,128)}', space=vmem, size = 0x12000, scoped, tag = 'internal scratch']
  #allocation2 [shape = 'f32[1,1]{1,0:T(1,128)S(6)}', space=smem, size = 0x200, scoped, tag = 'scoped memory for critic_forward.1']
  %s0 = inlined_call_operand.vmem [shape: bf16[1,8,128], index: 0, kind: input, shape index: {}]
  %s1 = inlined_call_operand.vmem [shape: bf16[128,8], index: 1, kind: input, shape index: {}]
  %s2 = inlined_call_operand.vmem [shape: bf16[128,128], index: 2, kind: input, shape index: {}]
  %s3 = inlined_call_operand.vmem [shape: f32[128,1], index: 3, kind: input, shape index: {}]
  %s4 = inlined_call_operand.vmem [shape: bf16[1,128], index: 4, kind: input, shape index: {}]
  %s5 = inlined_call_operand.<no memory space> [shape: f32[1,1], index: 5, kind: input, shape index: {}]
  %s6 = inlined_call_operand.vmem [shape: f32[1,1,128], index: 6, kind: output, shape index: {}]
  %s7 = sld [smem:[#allocation0]]
  $region34: #{critic_forward.1} parent=0
    _
  %s9 = ssub.s32 1, %s7
  %s10 = scalar_select 0, %s9, %s7
  %11 = sst [smem:[#allocation2]] %s5
  // Predicated region
  $region2: #{critic_forward.1} parent=0 // pred_check
    _
  $region3: #{critic_forward.1} parent=0 // pred_check_branch
    %13 = sbr.rel (0) target = $region5
  $region4: #{critic_forward.1} parent=0 // pred_region
    _
  $region5: #{critic_forward.1} parent=0 // pred_fallthru
    _
  // Predicated region
  $region6: #{critic_forward.1} parent=0 // pred_check
    _
  $region7: #{critic_forward.1} parent=0 // pred_check_branch
    %15 = sbr.rel (0) target = $region9
  $region8: #{critic_forward.1} parent=0 // pred_region
    _
  $region9: #{critic_forward.1} parent=0 // pred_fallthru
    _
  // Predicated region
  $region10: #{critic_forward.1} parent=0 // pred_check
    _
  $region11: #{critic_forward.1} parent=0 // pred_check_branch
    %17 = sbr.rel (0) target = $region13
  $region12: #{critic_forward.1} parent=0 // pred_region
    _
  $region13: #{critic_forward.1} parent=0 // pred_fallthru
    _
  // Predicated region
  $region14: #{critic_forward.1} parent=0 // pred_check
    _
  $region15: #{critic_forward.1} parent=0 // pred_check_branch
    %19 = sbr.rel (0) target = $region17
  $region16: #{critic_forward.1} parent=0 // pred_region
    _
  $region17: #{critic_forward.1} parent=0 // pred_fallthru
    _
  // Predicated region
  $region18: #{critic_forward.1} parent=0 // pred_check
    _
  $region19: #{critic_forward.1} parent=0 // pred_check_branch
    %21 = sbr.rel (0) target = $region21
  $region20: #{critic_forward.1} parent=0 // pred_region
    _
  $region21: #{critic_forward.1} parent=0 // pred_fallthru
    _
  // Predicated region
  $region22: #{critic_forward.1} parent=0 // pred_check
    _
  $region23: #{critic_forward.1} parent=0 // pred_check_branch
    %23 = sbr.rel (0) target = $region25
  $region24: #{critic_forward.1} parent=0 // pred_region
    _
  $region25: #{critic_forward.1} parent=0 // pred_fallthru
    _
  %v25 = vld [vmem:[%s1] sm:$0xf]
  %v26 = vld [vmem:[%s1 + $0x4] sm:$0xf]
  %v27 = vld [vmem:[%s1 + $0x8] sm:$0xf]
  %v28 = vld [vmem:[%s1 + $0xc] sm:$0xf]
  %v29 = vld [vmem:[%s1 + $0x10] sm:$0xf]
  %v30 = vld [vmem:[%s1 + $0x14] sm:$0xf]
  %v31 = vld [vmem:[%s1 + $0x18] sm:$0xf]
  %v32 = vld [vmem:[%s1 + $0x1c] sm:$0xf]
  %v33 = vld [vmem:[%s1 + $0x20] sm:$0xf]
  %v34 = vld [vmem:[%s1 + $0x24] sm:$0xf]
  %v35 = vld [vmem:[%s1 + $0x28] sm:$0xf]
  %v36 = vld [vmem:[%s1 + $0x2c] sm:$0xf]
  %v37 = vld [vmem:[%s1 + $0x30] sm:$0xf]
  %v38 = vld [vmem:[%s1 + $0x34] sm:$0xf]
  %v39 = vld [vmem:[%s1 + $0x38] sm:$0xf]
  %v40 = vld [vmem:[%s1 + $0x3c] sm:$0xf]
  %v41 = vld [vmem:[%s2] sm:$0xf]
  %v42 = vld [vmem:[%s2 + $0x4] sm:$0xf]
  %v43 = vld [vmem:[%s2 + $0x8] sm:$0xf]
  %v44 = vld [vmem:[%s2 + $0xc] sm:$0xf]
  %v45 = vld [vmem:[%s2 + $0x10] sm:$0xf]
  %v46 = vld [vmem:[%s2 + $0x14] sm:$0xf]
  %v47 = vld [vmem:[%s2 + $0x18] sm:$0xf]
  %v48 = vld [vmem:[%s2 + $0x1c] sm:$0xf]
  %v49 = vld [vmem:[%s2 + $0x20] sm:$0xf]
  %v50 = vld [vmem:[%s2 + $0x24] sm:$0xf]
  %v51 = vld [vmem:[%s2 + $0x28] sm:$0xf]
  %v52 = vld [vmem:[%s2 + $0x2c] sm:$0xf]
  %v53 = vld [vmem:[%s2 + $0x30] sm:$0xf]
  %v54 = vld [vmem:[%s2 + $0x34] sm:$0xf]
  %v55 = vld [vmem:[%s2 + $0x38] sm:$0xf]
  %v56 = vld [vmem:[%s2 + $0x3c] sm:$0xf]
  %v57 = vld [vmem:[%s3] sm:$0xff]
  %v58 = vld [vmem:[%s3 + $0x8] sm:$0xff]
  %v59 = vld [vmem:[%s3 + $0x10] sm:$0xff]
  %v60 = vld [vmem:[%s3 + $0x18] sm:$0xff]
  %v61 = vld [vmem:[%s3 + $0x20] sm:$0xff]
  %v62 = vld [vmem:[%s3 + $0x28] sm:$0xff]
  %v63 = vld [vmem:[%s3 + $0x30] sm:$0xff]
  %v64 = vld [vmem:[%s3 + $0x38] sm:$0xff]
  %v65 = vld [vmem:[%s3 + $0x40] sm:$0xff]
  %v66 = vld [vmem:[%s3 + $0x48] sm:$0xff]
  %v67 = vld [vmem:[%s3 + $0x50] sm:$0xff]
  %v68 = vld [vmem:[%s3 + $0x58] sm:$0xff]
  %v69 = vld [vmem:[%s3 + $0x60] sm:$0xff]
  %v70 = vld [vmem:[%s3 + $0x68] sm:$0xff]
  %v71 = vld [vmem:[%s3 + $0x70] sm:$0xff]
  %v72 = vld [vmem:[%s3 + $0x78] sm:$0xff]
  %v73 = vld [vmem:[%s4] sm:$0x1]
  %s74 = sld [smem:[#allocation2]]
  %v75 = vld [vmem:[%s0] sm:$0xf]
  %v92 = vunpack.c.l.b16 %v25
  %v93 = vunpack.c.l.b16 %v26
  %v94 = vunpack.c.l.b16 %v27
  %v95 = vunpack.c.l.b16 %v28
  %v96 = vunpack.c.l.b16 %v29
  %v97 = vunpack.c.l.b16 %v30
  %v98 = vunpack.c.l.b16 %v31
  %v99 = vunpack.c.l.b16 %v32
  %v100 = vunpack.c.l.b16 %v33
  %v101 = vunpack.c.l.b16 %v34
  %v102 = vunpack.c.l.b16 %v35
  %v103 = vunpack.c.l.b16 %v36
  %v104 = vunpack.c.l.b16 %v37
  %v105 = vunpack.c.l.b16 %v38
  %v106 = vunpack.c.l.b16 %v39
  %v107 = vunpack.c.l.b16 %v40
  %v108 = vpack.c.b16 %v93, %v92
  %v109 = vpack.c.b16 %v95, %v94
  %v110 = vpack.c.b16 %v97, %v96
  %v111 = vpack.c.b16 %v99, %v98
  %v112 = vpack.c.b16 %v101, %v100
  %v113 = vpack.c.b16 %v103, %v102
  %v114 = vpack.c.b16 %v105, %v104
  %v115 = vpack.c.b16 %v107, %v106
  %vm116 = vcmask 64512
  %v118 = vsel %vm116, %v108, 0
  %v121 = vsel %vm116, %v109, 0
  %v124 = vsel %vm116, %v110, 0
  %v127 = vsel %vm116, %v111, 0
  %v130 = vsel %vm116, %v112, 0
  %v133 = vsel %vm116, %v113, 0
  %v136 = vsel %vm116, %v114, 0
  %v139 = vsel %vm116, %v115, 0
  %vm141 = vcmask 1043456
  %v143 = vsel %vm141, %v75, 0
  %145 = vmatprep.subr.bf16.mxu0 0
  %146 = vmatpush1.bf16.msra.mxu0 0
  %147 = vmatprep.subr.bf16.mxu0 0
  %148 = vmatpush1.bf16.msra.mxu0 0
  %149 = vmatprep.subr.bf16.mxu0 0
  %150 = vmatpush1.bf16.msra.mxu0 0
  %151 = vmatprep.subr.bf16.mxu0 0
  %152 = vmatpush1.bf16.msra.mxu0 0
  %153 = vmatprep.subr.bf16.mxu0 0
  %154 = vmatpush1.bf16.msra.mxu0 0
  %155 = vmatprep.subr.bf16.mxu0 0
  %156 = vmatpush1.bf16.msra.mxu0 0
  %157 = vmatprep.subr.bf16.mxu0 0
  %158 = vmatpush1.bf16.msra.mxu0 0
  %159 = vmatprep.subr.bf16.mxu0 0
  %160 = vmatpush1.bf16.msra.mxu0 %v143
  %161 = vmatprep.subr.bf16.mxu0 0
  %162 = vmatpush2.bf16.msra.mxu0 0
  %163 = vmatprep.subr.bf16.mxu0 0
  %164 = vmatpush2.bf16.msra.mxu0 0
  %165 = vmatprep.subr.bf16.mxu0 0
  %166 = vmatpush2.bf16.msra.mxu0 0
  %167 = vmatprep.subr.bf16.mxu0 0
  %168 = vmatpush2.bf16.msra.mxu0 0
  %169 = vmatprep.subr.bf16.mxu0 0
  %170 = vmatpush2.bf16.msra.mxu0 0
  %171 = vmatprep.subr.bf16.mxu0 0
  %172 = vmatpush2.bf16.msra.mxu0 0
  %173 = vmatprep.subr.bf16.mxu0 0
  %174 = vmatpush2.bf16.msra.mxu0 0
  %175 = vmatprep.subr.bf16.mxu0 0
  %176 = vmatpush2.bf16.msra.mxu0 0
  %177 = vmatprep.mubr.bf16.mxu0 0
  %178 = vmatmul.mubr.bf16.gmra.mxu0 %v118
  %v179 = vpop.f32.mrf.mxu0
  %v180 = vadd.f32 0.0, %v179
  %v181 = vpop.f32.mrf.mxu0
  %v182 = vpop.f32.mrf.mxu0
  %v183 = vadd.f32 0.0, %v182
  %v184 = vpop.f32.mrf.mxu0
  %185 = vmatprep.mubr.bf16.mxu0 0
  %186 = vmatmul.mubr.bf16.gmra.mxu0 %v121
  %v187 = vpop.f32.mrf.mxu0
  %v188 = vadd.f32 0.0, %v187
  %v189 = vpop.f32.mrf.mxu0
  %v190 = vpop.f32.mrf.mxu0
  %v191 = vadd.f32 0.0, %v190
  %v192 = vpop.f32.mrf.mxu0
  %193 = vmatprep.mubr.bf16.mxu0 0
  %194 = vmatmul.mubr.bf16.gmra.mxu0 %v124
  %v195 = vpop.f32.mrf.mxu0
  %v196 = vadd.f32 0.0, %v195
  %v197 = vpop.f32.mrf.mxu0
  %v198 = vpop.f32.mrf.mxu0
  %v199 = vadd.f32 0.0, %v198
  %v200 = vpop.f32.mrf.mxu0
  %201 = vmatprep.mubr.bf16.mxu0 0
  %202 = vmatmul.mubr.bf16.gmra.mxu0 %v127
  %v203 = vpop.f32.mrf.mxu0
  %v204 = vadd.f32 0.0, %v203
  %v205 = vpop.f32.mrf.mxu0
  %v206 = vpop.f32.mrf.mxu0
  %v207 = vadd.f32 0.0, %v206
  %v208 = vpop.f32.mrf.mxu0
  %209 = vmatprep.mubr.bf16.mxu0 0
  %210 = vmatmul.mubr.bf16.gmra.mxu0 %v130
  %v211 = vpop.f32.mrf.mxu0
  %v212 = vadd.f32 0.0, %v211
  %v213 = vpop.f32.mrf.mxu0
  %v214 = vpop.f32.mrf.mxu0
  %v215 = vadd.f32 0.0, %v214
  %v216 = vpop.f32.mrf.mxu0
  %217 = vmatprep.mubr.bf16.mxu0 0
  %218 = vmatmul.mubr.bf16.gmra.mxu0 %v133
  %v219 = vpop.f32.mrf.mxu0
  %v220 = vadd.f32 0.0, %v219
  %v221 = vpop.f32.mrf.mxu0
  %v222 = vpop.f32.mrf.mxu0
  %v223 = vadd.f32 0.0, %v222
  %v224 = vpop.f32.mrf.mxu0
  %225 = vmatprep.mubr.bf16.mxu0 0
  %226 = vmatmul.mubr.bf16.gmra.mxu0 %v136
  %v227 = vpop.f32.mrf.mxu0
  %v228 = vadd.f32 0.0, %v227
  %v229 = vpop.f32.mrf.mxu0
  %v230 = vpop.f32.mrf.mxu0
  %v231 = vadd.f32 0.0, %v230
  %v232 = vpop.f32.mrf.mxu0
  %233 = vmatprep.mubr.bf16.mxu0 0
  %234 = vmatmul.mubr.bf16.gmra.mxu0 %v139
  %v235 = vpop.f32.mrf.mxu0
  %v236 = vadd.f32 0.0, %v235
  %v237 = vpop.f32.mrf.mxu0
  %v238 = vpop.f32.mrf.mxu0
  %v239 = vadd.f32 0.0, %v238
  %v240 = vpop.f32.mrf.mxu0
  %241 = vdwg.mxu0
  %v242 = vmul.f32 %v180, 0.5
  %v243 = vmul.f32 %v183, 0.5
  %v244 = vmul.f32 %v188, 0.5
  %v245 = vmul.f32 %v191, 0.5
  %v246 = vmul.f32 %v196, 0.5
  %v247 = vmul.f32 %v199, 0.5
  %v248 = vmul.f32 %v204, 0.5
  %v249 = vmul.f32 %v207, 0.5
  %v250 = vmul.f32 %v212, 0.5
  %v251 = vmul.f32 %v215, 0.5
  %v252 = vmul.f32 %v220, 0.5
  %v253 = vmul.f32 %v223, 0.5
  %v254 = vmul.f32 %v228, 0.5
  %v255 = vmul.f32 %v231, 0.5
  %v256 = vmul.f32 %v236, 0.5
  %v257 = vmul.f32 %v239, 0.5
  %v258 = vtanh.pop %v242
  %v259 = vtanh.pop %v243
  %v260 = vtanh.pop %v244
  %v261 = vtanh.pop %v245
  %v262 = vtanh.pop %v246
  %v263 = vtanh.pop %v247
  %v264 = vtanh.pop %v248
  %v265 = vtanh.pop %v249
  %v266 = vtanh.pop %v250
  %v267 = vtanh.pop %v251
  %v268 = vtanh.pop %v252
  %v269 = vtanh.pop %v253
  %v270 = vtanh.pop %v254
  %v271 = vtanh.pop %v255
  %v272 = vtanh.pop %v256
  %v273 = vtanh.pop %v257
  %v274 = vmul.f32 %v258, 0.5
  %v275 = vmul.f32 %v259, 0.5
  %v276 = vmul.f32 %v260, 0.5
  %v277 = vmul.f32 %v261, 0.5
  %v278 = vmul.f32 %v262, 0.5
  %v279 = vmul.f32 %v263, 0.5
  %v280 = vmul.f32 %v264, 0.5
  %v281 = vmul.f32 %v265, 0.5
  %v282 = vmul.f32 %v266, 0.5
  %v283 = vmul.f32 %v267, 0.5
  %v284 = vmul.f32 %v268, 0.5
  %v285 = vmul.f32 %v269, 0.5
  %v286 = vmul.f32 %v270, 0.5
  %v287 = vmul.f32 %v271, 0.5
  %v288 = vmul.f32 %v272, 0.5
  %v289 = vmul.f32 %v273, 0.5
  %v290 = vadd.f32 %v274, 0.5
  %v291 = vadd.f32 %v275, 0.5
  %v292 = vadd.f32 %v276, 0.5
  %v293 = vadd.f32 %v277, 0.5
  %v294 = vadd.f32 %v278, 0.5
  %v295 = vadd.f32 %v279, 0.5
  %v296 = vadd.f32 %v280, 0.5
  %v297 = vadd.f32 %v281, 0.5
  %v298 = vadd.f32 %v282, 0.5
  %v299 = vadd.f32 %v283, 0.5
  %v300 = vadd.f32 %v284, 0.5
  %v301 = vadd.f32 %v285, 0.5
  %v302 = vadd.f32 %v286, 0.5
  %v303 = vadd.f32 %v287, 0.5
  %v304 = vadd.f32 %v288, 0.5
  %v305 = vadd.f32 %v289, 0.5
  %v306 = vmul.f32 %v180, %v290
  %v307 = vmul.f32 %v183, %v291
  %v308 = vmul.f32 %v188, %v292
  %v309 = vmul.f32 %v191, %v293
  %v310 = vmul.f32 %v196, %v294
  %v311 = vmul.f32 %v199, %v295
  %v312 = vmul.f32 %v204, %v296
  %v313 = vmul.f32 %v207, %v297
  %v314 = vmul.f32 %v212, %v298
  %v315 = vmul.f32 %v215, %v299
  %v316 = vmul.f32 %v220, %v300
  %v317 = vmul.f32 %v223, %v301
  %v318 = vmul.f32 %v228, %v302
  %v319 = vmul.f32 %v231, %v303
  %v320 = vmul.f32 %v236, %v304
  %v321 = vmul.f32 %v239, %v305
  %v322 = vpack.c.bf16 %v307, %v306
  %v323 = vpack.c.bf16 %v309, %v308
  %v324 = vpack.c.bf16 %v311, %v310
  %v325 = vpack.c.bf16 %v313, %v312
  %v326 = vpack.c.bf16 %v315, %v314
  %v327 = vpack.c.bf16 %v317, %v316
  %v328 = vpack.c.bf16 %v319, %v318
  %v329 = vpack.c.bf16 %v321, %v320
  %331 = vset.pattern.permute.xlu0 0
  %332 = vperm.xlu0 %331, %v57
  %v333 = vpop.permute.xlu0 %332
  %336 = vset.pattern.permute.xlu0 0
  %337 = vperm.xlu0 %336, %v58
  %v338 = vpop.permute.xlu0 %337
  %341 = vset.pattern.permute.xlu0 0
  %342 = vperm.xlu0 %341, %v59
  %v343 = vpop.permute.xlu0 %342
  %346 = vset.pattern.permute.xlu0 0
  %347 = vperm.xlu0 %346, %v60
  %v348 = vpop.permute.xlu0 %347
  %351 = vset.pattern.permute.xlu0 0
  %352 = vperm.xlu0 %351, %v61
  %v353 = vpop.permute.xlu0 %352
  %356 = vset.pattern.permute.xlu0 0
  %357 = vperm.xlu0 %356, %v62
  %v358 = vpop.permute.xlu0 %357
  %361 = vset.pattern.permute.xlu0 0
  %362 = vperm.xlu0 %361, %v63
  %v363 = vpop.permute.xlu0 %362
  %366 = vset.pattern.permute.xlu0 0
  %367 = vperm.xlu0 %366, %v64
  %v368 = vpop.permute.xlu0 %367
  %371 = vset.pattern.permute.xlu0 0
  %372 = vperm.xlu0 %371, %v65
  %v373 = vpop.permute.xlu0 %372
  %376 = vset.pattern.permute.xlu0 0
  %377 = vperm.xlu0 %376, %v66
  %v378 = vpop.permute.xlu0 %377
  %381 = vset.pattern.permute.xlu0 0
  %382 = vperm.xlu0 %381, %v67
  %v383 = vpop.permute.xlu0 %382
  %386 = vset.pattern.permute.xlu0 0
  %387 = vperm.xlu0 %386, %v68
  %v388 = vpop.permute.xlu0 %387
  %391 = vset.pattern.permute.xlu0 0
  %392 = vperm.xlu0 %391, %v69
  %v393 = vpop.permute.xlu0 %392
  %396 = vset.pattern.permute.xlu0 0
  %397 = vperm.xlu0 %396, %v70
  %v398 = vpop.permute.xlu0 %397
  %401 = vset.pattern.permute.xlu0 0
  %402 = vperm.xlu0 %401, %v71
  %v403 = vpop.permute.xlu0 %402
  %406 = vset.pattern.permute.xlu0 0
  %407 = vperm.xlu0 %406, %v72
  %v408 = vpop.permute.xlu0 %407
  %v426 = vunpack.c.l.b16 %v41
  %v427 = vunpack.c.l.b16 %v42
  %v428 = vunpack.c.l.b16 %v43
  %v429 = vunpack.c.l.b16 %v44
  %v430 = vunpack.c.l.b16 %v45
  %v431 = vunpack.c.l.b16 %v46
  %v432 = vunpack.c.l.b16 %v47
  %v433 = vunpack.c.l.b16 %v48
  %v434 = vunpack.c.l.b16 %v49
  %v435 = vunpack.c.l.b16 %v50
  %v436 = vunpack.c.l.b16 %v51
  %v437 = vunpack.c.l.b16 %v52
  %v438 = vunpack.c.l.b16 %v53
  %v439 = vunpack.c.l.b16 %v54
  %v440 = vunpack.c.l.b16 %v55
  %v441 = vunpack.c.l.b16 %v56
  %v442 = vpack.c.b16 %v427, %v426
  %v443 = vpack.c.b16 %v429, %v428
  %v444 = vpack.c.b16 %v431, %v430
  %v445 = vpack.c.b16 %v433, %v432
  %v446 = vpack.c.b16 %v435, %v434
  %v447 = vpack.c.b16 %v437, %v436
  %v448 = vpack.c.b16 %v439, %v438
  %v449 = vpack.c.b16 %v441, %v440
  %458 = vmatprep.subr.bf16.mxu0 0
  %459 = vmatpush1.bf16.msra.mxu0 %v329
  %460 = vmatprep.subr.bf16.mxu0 0
  %461 = vmatpush1.bf16.msra.mxu0 %v328
  %462 = vmatprep.subr.bf16.mxu0 0
  %463 = vmatpush1.bf16.msra.mxu0 %v327
  %464 = vmatprep.subr.bf16.mxu0 0
  %465 = vmatpush1.bf16.msra.mxu0 %v326
  %466 = vmatprep.subr.bf16.mxu0 0
  %467 = vmatpush1.bf16.msra.mxu0 %v325
  %468 = vmatprep.subr.bf16.mxu0 0
  %469 = vmatpush1.bf16.msra.mxu0 %v324
  %470 = vmatprep.subr.bf16.mxu0 0
  %471 = vmatpush1.bf16.msra.mxu0 %v323
  %472 = vmatprep.subr.bf16.mxu0 0
  %473 = vmatpush1.bf16.msra.mxu0 %v322
  %474 = vmatprep.subr.bf16.mxu0 0
  %475 = vmatpush2.bf16.msra.mxu0 0
  %476 = vmatprep.subr.bf16.mxu0 0
  %477 = vmatpush2.bf16.msra.mxu0 0
  %478 = vmatprep.subr.bf16.mxu0 0
  %479 = vmatpush2.bf16.msra.mxu0 0
  %480 = vmatprep.subr.bf16.mxu0 0
  %481 = vmatpush2.bf16.msra.mxu0 0
  %482 = vmatprep.subr.bf16.mxu0 0
  %483 = vmatpush2.bf16.msra.mxu0 0
  %484 = vmatprep.subr.bf16.mxu0 0
  %485 = vmatpush2.bf16.msra.mxu0 0
  %486 = vmatprep.subr.bf16.mxu0 0
  %487 = vmatpush2.bf16.msra.mxu0 0
  %488 = vmatprep.subr.bf16.mxu0 0
  %489 = vmatpush2.bf16.msra.mxu0 0
  %490 = vmatprep.mubr.bf16.mxu0 0
  %491 = vmatmul.mubr.bf16.gmra.mxu0 %v442
  %v492 = vpop.f32.mrf.mxu0
  %v493 = vadd.f32 %v333, %v492
  %v494 = vpop.f32.mrf.mxu0
  %v495 = vpop.f32.mrf.mxu0
  %v496 = vadd.f32 %v338, %v495
  %v497 = vpop.f32.mrf.mxu0
  %498 = vmatprep.mubr.bf16.mxu0 0
  %499 = vmatmul.mubr.bf16.gmra.mxu0 %v443
  %v500 = vpop.f32.mrf.mxu0
  %v501 = vadd.f32 %v343, %v500
  %v502 = vpop.f32.mrf.mxu0
  %v503 = vpop.f32.mrf.mxu0
  %v504 = vadd.f32 %v348, %v503
  %v505 = vpop.f32.mrf.mxu0
  %506 = vmatprep.mubr.bf16.mxu0 0
  %507 = vmatmul.mubr.bf16.gmra.mxu0 %v444
  %v508 = vpop.f32.mrf.mxu0
  %v509 = vadd.f32 %v353, %v508
  %v510 = vpop.f32.mrf.mxu0
  %v511 = vpop.f32.mrf.mxu0
  %v512 = vadd.f32 %v358, %v511
  %v513 = vpop.f32.mrf.mxu0
  %514 = vmatprep.mubr.bf16.mxu0 0
  %515 = vmatmul.mubr.bf16.gmra.mxu0 %v445
  %v516 = vpop.f32.mrf.mxu0
  %v517 = vadd.f32 %v363, %v516
  %v518 = vpop.f32.mrf.mxu0
  %v519 = vpop.f32.mrf.mxu0
  %v520 = vadd.f32 %v368, %v519
  %v521 = vpop.f32.mrf.mxu0
  %522 = vmatprep.mubr.bf16.mxu0 0
  %523 = vmatmul.mubr.bf16.gmra.mxu0 %v446
  %v524 = vpop.f32.mrf.mxu0
  %v525 = vadd.f32 %v373, %v524
  %v526 = vpop.f32.mrf.mxu0
  %v527 = vpop.f32.mrf.mxu0
  %v528 = vadd.f32 %v378, %v527
  %v529 = vpop.f32.mrf.mxu0
  %530 = vmatprep.mubr.bf16.mxu0 0
  %531 = vmatmul.mubr.bf16.gmra.mxu0 %v447
  %v532 = vpop.f32.mrf.mxu0
  %v533 = vadd.f32 %v383, %v532
  %v534 = vpop.f32.mrf.mxu0
  %v535 = vpop.f32.mrf.mxu0
  %v536 = vadd.f32 %v388, %v535
  %v537 = vpop.f32.mrf.mxu0
  %538 = vmatprep.mubr.bf16.mxu0 0
  %539 = vmatmul.mubr.bf16.gmra.mxu0 %v448
  %v540 = vpop.f32.mrf.mxu0
  %v541 = vadd.f32 %v393, %v540
  %v542 = vpop.f32.mrf.mxu0
  %v543 = vpop.f32.mrf.mxu0
  %v544 = vadd.f32 %v398, %v543
  %v545 = vpop.f32.mrf.mxu0
  %546 = vmatprep.mubr.bf16.mxu0 0
  %547 = vmatmul.mubr.bf16.gmra.mxu0 %v449
  %v548 = vpop.f32.mrf.mxu0
  %v549 = vadd.f32 %v403, %v548
  %v550 = vpop.f32.mrf.mxu0
  %v551 = vpop.f32.mrf.mxu0
  %v552 = vadd.f32 %v408, %v551
  %v553 = vpop.f32.mrf.mxu0
  %554 = vdwg.mxu0
  %v555 = vmul.f32 %v493, 0.5
  %v556 = vmul.f32 %v496, 0.5
  %v557 = vmul.f32 %v501, 0.5
  %v558 = vmul.f32 %v504, 0.5
  %v559 = vmul.f32 %v509, 0.5
  %v560 = vmul.f32 %v512, 0.5
  %v561 = vmul.f32 %v517, 0.5
  %v562 = vmul.f32 %v520, 0.5
  %v563 = vmul.f32 %v525, 0.5
  %v564 = vmul.f32 %v528, 0.5
  %v565 = vmul.f32 %v533, 0.5
  %v566 = vmul.f32 %v536, 0.5
  %v567 = vmul.f32 %v541, 0.5
  %v568 = vmul.f32 %v544, 0.5
  %v569 = vmul.f32 %v549, 0.5
  %v570 = vmul.f32 %v552, 0.5
  %v571 = vtanh.pop %v555
  %v572 = vtanh.pop %v556
  %v573 = vtanh.pop %v557
  %v574 = vtanh.pop %v558
  %v575 = vtanh.pop %v559
  %v576 = vtanh.pop %v560
  %v577 = vtanh.pop %v561
  %v578 = vtanh.pop %v562
  %v579 = vtanh.pop %v563
  %v580 = vtanh.pop %v564
  %v581 = vtanh.pop %v565
  %v582 = vtanh.pop %v566
  %v583 = vtanh.pop %v567
  %v584 = vtanh.pop %v568
  %v585 = vtanh.pop %v569
  %v586 = vtanh.pop %v570
  %v587 = vmul.f32 %v571, 0.5
  %v588 = vmul.f32 %v572, 0.5
  %v589 = vmul.f32 %v573, 0.5
  %v590 = vmul.f32 %v574, 0.5
  %v591 = vmul.f32 %v575, 0.5
  %v592 = vmul.f32 %v576, 0.5
  %v593 = vmul.f32 %v577, 0.5
  %v594 = vmul.f32 %v578, 0.5
  %v595 = vmul.f32 %v579, 0.5
  %v596 = vmul.f32 %v580, 0.5
  %v597 = vmul.f32 %v581, 0.5
  %v598 = vmul.f32 %v582, 0.5
  %v599 = vmul.f32 %v583, 0.5
  %v600 = vmul.f32 %v584, 0.5
  %v601 = vmul.f32 %v585, 0.5
  %v602 = vmul.f32 %v586, 0.5
  %v603 = vadd.f32 %v587, 0.5
  %v604 = vadd.f32 %v588, 0.5
  %v605 = vadd.f32 %v589, 0.5
  %v606 = vadd.f32 %v590, 0.5
  %v607 = vadd.f32 %v591, 0.5
  %v608 = vadd.f32 %v592, 0.5
  %v609 = vadd.f32 %v593, 0.5
  %v610 = vadd.f32 %v594, 0.5
  %v611 = vadd.f32 %v595, 0.5
  %v612 = vadd.f32 %v596, 0.5
  %v613 = vadd.f32 %v597, 0.5
  %v614 = vadd.f32 %v598, 0.5
  %v615 = vadd.f32 %v599, 0.5
  %v616 = vadd.f32 %v600, 0.5
  %v617 = vadd.f32 %v601, 0.5
  %v618 = vadd.f32 %v602, 0.5
  %v619 = vmul.f32 %v493, %v603
  %v620 = vmul.f32 %v496, %v604
  %v621 = vmul.f32 %v501, %v605
  %v622 = vmul.f32 %v504, %v606
  %v623 = vmul.f32 %v509, %v607
  %v624 = vmul.f32 %v512, %v608
  %v625 = vmul.f32 %v517, %v609
  %v626 = vmul.f32 %v520, %v610
  %v627 = vmul.f32 %v525, %v611
  %v628 = vmul.f32 %v528, %v612
  %v629 = vmul.f32 %v533, %v613
  %v630 = vmul.f32 %v536, %v614
  %v631 = vmul.f32 %v541, %v615
  %v632 = vmul.f32 %v544, %v616
  %v633 = vmul.f32 %v549, %v617
  %v634 = vmul.f32 %v552, %v618
  %v635 = vpack.c.bf16 %v620, %v619
  %v636 = vpack.c.bf16 %v622, %v621
  %v637 = vpack.c.bf16 %v624, %v623
  %v638 = vpack.c.bf16 %v626, %v625
  %v639 = vpack.c.bf16 %v628, %v627
  %v640 = vpack.c.bf16 %v630, %v629
  %v641 = vpack.c.bf16 %v632, %v631
  %v642 = vpack.c.bf16 %v634, %v633
  %v643 = vstv %s74
  %644 = vmatprep.subr.bf16.mxu0 0
  %645 = vmatpush1.bf16.msra.mxu0 %v642
  %646 = vmatprep.subr.bf16.mxu0 0
  %647 = vmatpush1.bf16.msra.mxu0 %v641
  %648 = vmatprep.subr.bf16.mxu0 0
  %649 = vmatpush1.bf16.msra.mxu0 %v640
  %650 = vmatprep.subr.bf16.mxu0 0
  %651 = vmatpush1.bf16.msra.mxu0 %v639
  %652 = vmatprep.subr.bf16.mxu0 0
  %653 = vmatpush1.bf16.msra.mxu0 %v638
  %654 = vmatprep.subr.bf16.mxu0 0
  %655 = vmatpush1.bf16.msra.mxu0 %v637
  %656 = vmatprep.subr.bf16.mxu0 0
  %657 = vmatpush1.bf16.msra.mxu0 %v636
  %658 = vmatprep.subr.bf16.mxu0 0
  %659 = vmatpush1.bf16.msra.mxu0 %v635
  %660 = vmatprep.subr.bf16.mxu0 0
  %661 = vmatpush2.bf16.msra.mxu0 0
  %662 = vmatprep.subr.bf16.mxu0 0
  %663 = vmatpush2.bf16.msra.mxu0 0
  %664 = vmatprep.subr.bf16.mxu0 0
  %665 = vmatpush2.bf16.msra.mxu0 0
  %666 = vmatprep.subr.bf16.mxu0 0
  %667 = vmatpush2.bf16.msra.mxu0 0
  %668 = vmatprep.subr.bf16.mxu0 0
  %669 = vmatpush2.bf16.msra.mxu0 0
  %670 = vmatprep.subr.bf16.mxu0 0
  %671 = vmatpush2.bf16.msra.mxu0 0
  %672 = vmatprep.subr.bf16.mxu0 0
  %673 = vmatpush2.bf16.msra.mxu0 0
  %674 = vmatprep.subr.bf16.mxu0 0
  %675 = vmatpush2.bf16.msra.mxu0 0
  %676 = vmatprep.mubr.bf16.mxu0 0
  %677 = vmatmul.mubr.bf16.gmra.mxu0 %v73
  %v678 = vpop.f32.mrf.mxu0
  %v679 = vadd.f32 %v643, %v678
  %v680 = vpop.f32.mrf.mxu0
  %v681 = vpop.f32.mrf.mxu0
  %v682 = vpop.f32.mrf.mxu0
  %683 = vdwg.mxu0
  %684 = vst [vmem:[%s6] sm:$0x1] %v679
  // Predicated region
  $region26: #{critic_forward.1} parent=0 // pred_check
    _
  $region27: #{critic_forward.1} parent=0 // pred_check_branch
    %686 = sbr.rel (0) target = $region29
  $region28: #{critic_forward.1} parent=0 // pred_region
    _
  $region29: #{critic_forward.1} parent=0 // pred_fallthru
    _
  // Predicated region
  $region30: #{critic_forward.1} parent=0 // pred_check
    _
  $region31: #{critic_forward.1} parent=0 // pred_check_branch
    %688 = sbr.rel (0) target = $region33
  $region32: #{critic_forward.1} parent=0 // pred_region
    _
  $region33: #{critic_forward.1} parent=0 // pred_fallthru
    _

</llo_original>
